<compile_context>
chip_gen: v7x
topology: tpu7x:2x2x1
jax: 0.10.0
libtpu: 0.0.40
codegen_flags: <defaults>
</compile_context>

<pallas_src>
import jax
import jax.numpy as jnp
from jax.experimental import pallas as pl
from jax.experimental.pallas import tpu as pltpu

IN_FEATURES = 17
HIDDEN1 = 50
HIDDEN2 = 100
OUT_FEATURES = 1
FEAT_PAD = 128      # lane-dense padded input width
MAX_TILE = 512      # max batch rows per grid step


def mlp_kernel(x_ref, w1_ref, b1_ref, w2_ref, b2_ref, w3_ref, b3_ref, o_ref):
    # Layer 1: (TM,128)bf16 @ (128,50)bf16 -> f32 acc, + bias, ReLU.
    h1 = jnp.dot(x_ref[...], w1_ref[...], preferred_element_type=jnp.float32)
    h1 = jnp.maximum(h1 + b1_ref[...], 0.0)
    # Layer 2: (TM,50)bf16 @ (50,100)bf16 -> f32 acc, + bias, ReLU.
    h2 = jnp.dot(h1.astype(jnp.bfloat16), w2_ref[...],
                 preferred_element_type=jnp.float32)
    h2 = jnp.maximum(h2 + b2_ref[...], 0.0)
    # Layer 3 (100 -> 1): VPU multiply by the (1,100) weight row + lane reduce
    # (avoids an N=1 MXU matmul).
    o = jnp.sum(h2 * w3_ref[...], axis=-1, keepdims=True) + b3_ref[...]
    o_ref[...] = o.astype(o_ref.dtype)


def _round_up(n, m):
    return ((n + m - 1) // m) * m


def placeholder_net_forward(x, params, max_tile=MAX_TILE):
    """x: (B, 17) float32.  params: PyTorch-layout dict (w: (out,in), b: (out,))."""
    B = x.shape[0]
    TM = min(max_tile, _round_up(max(B, 1), 16))
    B_pad = _round_up(B, TM)

    # Lane-dense, bf16, zero-padded input slab (B_pad, 128).
    x_pad = jnp.zeros((B_pad, FEAT_PAD), jnp.bfloat16)
    x_pad = x_pad.at[:B, :IN_FEATURES].set(x.astype(jnp.bfloat16))

    # Kernel-layout weights: (in, out); w1 rows zero-padded 17 -> 128.
    w1 = jnp.zeros((FEAT_PAD, HIDDEN1), jnp.bfloat16)
    w1 = w1.at[:IN_FEATURES, :].set(params["w1"].T.astype(jnp.bfloat16))
    b1 = params["b1"].reshape(1, HIDDEN1).astype(jnp.float32)
    w2 = params["w2"].T.astype(jnp.bfloat16)                    # (50, 100)
    b2 = params["b2"].reshape(1, HIDDEN2).astype(jnp.float32)
    w3 = params["w3"].reshape(1, HIDDEN2).astype(jnp.float32)   # (1, 100) row
    b3 = params["b3"].reshape(1, 1).astype(jnp.float32)

    def tile_spec(shape):
        return pl.BlockSpec(shape, lambda i: (i, 0))

    def resident_spec(shape):
        return pl.BlockSpec(shape, lambda i: (0, 0))

    out_pad = pl.pallas_call(
        mlp_kernel,
        out_shape=jax.ShapeDtypeStruct((B_pad, OUT_FEATURES), jnp.float32),
        grid=(B_pad // TM,),
        in_specs=[
            tile_spec((TM, FEAT_PAD)),
            resident_spec(w1.shape), resident_spec(b1.shape),
            resident_spec(w2.shape), resident_spec(b2.shape),
            resident_spec(w3.shape), resident_spec(b3.shape),
        ],
        out_specs=tile_spec((TM, OUT_FEATURES)),
        compiler_params=pltpu.CompilerParams(
            dimension_semantics=("parallel",),
            vmem_limit_bytes=32 * 1024 * 1024,
        ),
    )(x_pad, w1, b1, w2, b2, w3, b3)
    return out_pad[:B]


def init_params(key):
    """Deterministic init mimicking nn.Linear (weight: (out,in), bias: (out,))."""
    def linear_init(k, in_f, out_f):
        kw, kb = jax.random.split(k)
        bound = 1.0 / jnp.sqrt(in_f)
        w = jax.random.uniform(kw, (out_f, in_f), jnp.float32, -bound, bound)
        b = jax.random.uniform(kb, (out_f,), jnp.float32, -bound, bound)
        return w, b

    k1, k2, k3 = jax.random.split(key, 3)
    w1, b1 = linear_init(k1, IN_FEATURES, HIDDEN1)
    w2, b2 = linear_init(k2, HIDDEN1, HIDDEN2)
    w3, b3 = linear_init(k3, HIDDEN2, OUT_FEATURES)
    return {"w1": w1, "b1": b1, "w2": w2, "b2": b2, "w3": w3, "b3": b3}


def reference_forward(x, params):
    """Pure-JAX reference matching the kernel's bf16-input / f32-accumulate numerics."""
    f32 = jnp.float32
    h1 = jnp.dot(x.astype(jnp.bfloat16), params["w1"].T.astype(jnp.bfloat16),
                 preferred_element_type=f32) + params["b1"]
    h1 = jnp.maximum(h1, 0.0)
    h2 = jnp.dot(h1.astype(jnp.bfloat16), params["w2"].T.astype(jnp.bfloat16),
                 preferred_element_type=f32) + params["b2"]
    h2 = jnp.maximum(h2, 0.0)
    return jnp.dot(h2, params["w3"].T.astype(f32),
                   preferred_element_type=f32) + params["b3"]


if __name__ == "__main__":
    key = jax.random.PRNGKey(0)
    kp, kx = jax.random.split(key)
    params = init_params(kp)

    B = 8
    x = jax.random.normal(kx, (B, IN_FEATURES), jnp.float32)

    out = placeholder_net_forward(x, params)
    out = jax.block_until_ready(out)

    ref = reference_forward(x, params)
    assert out.shape == (B, OUT_FEATURES), out.shape
    assert jnp.allclose(out, ref, atol=5e-4, rtol=5e-4), (
        "mismatch vs reference, max abs err = "
        + str(float(jnp.max(jnp.abs(out - ref)))))

    print("KERNEL_OK")
</pallas_src>

<mosaic_0001>
module attributes {stable_mosaic.version = 11 : i64} {
  func.func @mlp_kernel(%arg0: i32, %arg1: memref<16x128xbf16, #tpu.memory_space<vmem>>, %arg2: memref<128x50xbf16, #tpu.memory_space<vmem>>, %arg3: memref<1x50xf32, #tpu.memory_space<vmem>>, %arg4: memref<50x100xbf16, #tpu.memory_space<vmem>>, %arg5: memref<1x100xf32, #tpu.memory_space<vmem>>, %arg6: memref<1x100xf32, #tpu.memory_space<vmem>>, %arg7: memref<1x1xf32, #tpu.memory_space<vmem>>, %arg8: memref<16x1xf32, #tpu.memory_space<vmem>>) attributes {dimension_semantics = [#tpu.dimension_semantics<parallel>], iteration_bounds = array<i64: 1>, scalar_prefetch = 0 : i64, scratch_operands = 0 : i64, tpu.core_type = #tpu.core_type<tc>, window_params = [{transform_indices = @transform_0, window_bounds = array<i64: 16, 128>}, {pipeline_mode = #tpu.pipeline_mode<synchronous>, transform_indices = @transform_1, window_bounds = array<i64: 128, 50>}, {pipeline_mode = #tpu.pipeline_mode<synchronous>, transform_indices = @transform_2, window_bounds = array<i64: 1, 50>}, {pipeline_mode = #tpu.pipeline_mode<synchronous>, transform_indices = @transform_3, window_bounds = array<i64: 50, 100>}, {pipeline_mode = #tpu.pipeline_mode<synchronous>, transform_indices = @transform_4, window_bounds = array<i64: 1, 100>}, {pipeline_mode = #tpu.pipeline_mode<synchronous>, transform_indices = @transform_5, window_bounds = array<i64: 1, 100>}, {pipeline_mode = #tpu.pipeline_mode<synchronous>, transform_indices = @transform_6, window_bounds = array<i64: 1, 1>}, {transform_indices = @transform_7, window_bounds = array<i64: 16, 1>}]} {
    %c0 = arith.constant 0 : index
    %c0_0 = arith.constant 0 : index
    %0 = vector.load %arg1[%c0, %c0_0] : memref<16x128xbf16, #tpu.memory_space<vmem>>, vector<16x128xbf16>
    %c0_1 = arith.constant 0 : index
    %c0_2 = arith.constant 0 : index
    %1 = vector.load %arg2[%c0_1, %c0_2] : memref<128x50xbf16, #tpu.memory_space<vmem>>, vector<128x50xbf16>
    %cst = arith.constant dense<0.000000e+00> : vector<16x50xf32>
    %2 = tpu.matmul %0, %1, %cst {dimension_numbers = #tpu.dot_dimension_numbers<[1], [0], [0], [1], [0, 0, 1, 1], [], []>} : vector<16x128xbf16>, vector<128x50xbf16>, vector<16x50xf32> -> vector<16x50xf32>
    %c0_3 = arith.constant 0 : index
    %c0_4 = arith.constant 0 : index
    %3 = vector.load %arg3[%c0_3, %c0_4] : memref<1x50xf32, #tpu.memory_space<vmem>>, vector<1x50xf32>
    %4 = vector.broadcast %3 : vector<1x50xf32> to vector<16x50xf32>
    %5 = arith.addf %2, %4 : vector<16x50xf32>
    %cst_5 = arith.constant 0.000000e+00 : f32
    %6 = vector.broadcast %cst_5 : f32 to vector<16x50xf32>
    %7 = arith.maximumf %5, %6 : vector<16x50xf32>
    %8 = arith.truncf %7 : vector<16x50xf32> to vector<16x50xbf16>
    %c0_6 = arith.constant 0 : index
    %c0_7 = arith.constant 0 : index
    %9 = vector.load %arg4[%c0_6, %c0_7] : memref<50x100xbf16, #tpu.memory_space<vmem>>, vector<50x100xbf16>
    %cst_8 = arith.constant dense<0.000000e+00> : vector<16x100xf32>
    %10 = tpu.matmul %8, %9, %cst_8 {dimension_numbers = #tpu.dot_dimension_numbers<[1], [0], [0], [1], [0, 0, 1, 1], [], []>} : vector<16x50xbf16>, vector<50x100xbf16>, vector<16x100xf32> -> vector<16x100xf32>
    %c0_9 = arith.constant 0 : index
    %c0_10 = arith.constant 0 : index
    %11 = vector.load %arg5[%c0_9, %c0_10] : memref<1x100xf32, #tpu.memory_space<vmem>>, vector<1x100xf32>
    %12 = vector.broadcast %11 : vector<1x100xf32> to vector<16x100xf32>
    %13 = arith.addf %10, %12 : vector<16x100xf32>
    %cst_11 = arith.constant 0.000000e+00 : f32
    %14 = vector.broadcast %cst_11 : f32 to vector<16x100xf32>
    %15 = arith.maximumf %13, %14 : vector<16x100xf32>
    %c0_12 = arith.constant 0 : index
    %c0_13 = arith.constant 0 : index
    %16 = vector.load %arg6[%c0_12, %c0_13] : memref<1x100xf32, #tpu.memory_space<vmem>>, vector<1x100xf32>
    %17 = vector.broadcast %16 : vector<1x100xf32> to vector<16x100xf32>
    %18 = arith.mulf %15, %17 : vector<16x100xf32>
    %cst_14 = arith.constant dense<0.000000e+00> : vector<16xf32>
    %19 = vector.multi_reduction <add>, %18, %cst_14 [1] : vector<16x100xf32> to vector<16xf32>
    %20 = vector.shape_cast %19 : vector<16xf32> to vector<16x1xf32>
    %c0_15 = arith.constant 0 : index
    %c0_16 = arith.constant 0 : index
    %21 = vector.load %arg7[%c0_15, %c0_16] : memref<1x1xf32, #tpu.memory_space<vmem>>, vector<1x1xf32>
    %22 = vector.broadcast %21 : vector<1x1xf32> to vector<16x1xf32>
    %23 = arith.addf %20, %22 : vector<16x1xf32>
    %c0_17 = arith.constant 0 : index
    %c0_18 = arith.constant 0 : index
    %24 = vector.load %arg8[%c0_17, %c0_18] : memref<16x1xf32, #tpu.memory_space<vmem>>, vector<16x1xf32>
    tpu.vector_store %arg8[%c0_17, %c0_18], %23 {strides = array<i32>} : memref<16x1xf32, #tpu.memory_space<vmem>>, vector<16x1xf32>,
    return
  }
  func.func @transform_0(%arg0: i32) -> (i32, i32) {
    %c0_i32 = arith.constant 0 : i32
    %c0_i32_0 = arith.constant 0 : i32
    return %arg0, %c0_i32 : i32, i32
  }
  func.func @transform_1(%arg0: i32) -> (i32, i32) {
    %c0_i32 = arith.constant 0 : i32
    %c0_i32_0 = arith.constant 0 : i32
    %c0_i32_1 = arith.constant 0 : i32
    return %c0_i32, %c0_i32_0 : i32, i32
  }
  func.func @transform_2(%arg0: i32) -> (i32, i32) {
    %c0_i32 = arith.constant 0 : i32
    %c0_i32_0 = arith.constant 0 : i32
    %c0_i32_1 = arith.constant 0 : i32
    return %c0_i32, %c0_i32_0 : i32, i32
  }
  func.func @transform_3(%arg0: i32) -> (i32, i32) {
    %c0_i32 = arith.constant 0 : i32
    %c0_i32_0 = arith.constant 0 : i32
    %c0_i32_1 = arith.constant 0 : i32
    return %c0_i32, %c0_i32_0 : i32, i32
  }
  func.func @transform_4(%arg0: i32) -> (i32, i32) {
    %c0_i32 = arith.constant 0 : i32
    %c0_i32_0 = arith.constant 0 : i32
    %c0_i32_1 = arith.constant 0 : i32
    return %c0_i32, %c0_i32_0 : i32, i32
  }
  func.func @transform_5(%arg0: i32) -> (i32, i32) {
    %c0_i32 = arith.constant 0 : i32
    %c0_i32_0 = arith.constant 0 : i32
    %c0_i32_1 = arith.constant 0 : i32
    return %c0_i32, %c0_i32_0 : i32, i32
  }
  func.func @transform_6(%arg0: i32) -> (i32, i32) {
    %c0_i32 = arith.constant 0 : i32
    %c0_i32_0 = arith.constant 0 : i32
    %c0_i32_1 = arith.constant 0 : i32
    return %c0_i32, %c0_i32_0 : i32, i32
  }
  func.func @transform_7(%arg0: i32) -> (i32, i32) {
    %c0_i32 = arith.constant 0 : i32
    %c0_i32_0 = arith.constant 0 : i32
    return %arg0, %c0_i32 : i32, i32
  }
}

</mosaic_0001>

<llo_original>
// kernel: tpu_custom_call.1
$region0: #{tpu_custom_call.1}
  #allocation0 [shape = 'u32[]', space=smem, size = 0x4, offset = 0x4, fixed_abs, tag = 'smem constant byte address 0x4 - core index']
  #allocation1 [shape = 'u32[144,128]{1,0:T(1,128)}', space=vmem, size = 0x12000, scoped, tag = 'internal scratch']
  #allocation2 [shape = 'f32[1,1]{1,0:T(1,128)S(1)}', space=vmem, size = 0x200, scoped, tag = 'scoped memory for tpu_custom_call.1']
  %s0 = inlined_call_operand.vmem [shape: bf16[16,128], index: 0, kind: input, shape index: {}]
  %s1 = inlined_call_operand.vmem [shape: bf16[128,50], index: 1, kind: input, shape index: {}]
  %s2 = inlined_call_operand.vmem [shape: f32[1,50], index: 2, kind: input, shape index: {}]
  %s3 = inlined_call_operand.vmem [shape: bf16[50,100], index: 3, kind: input, shape index: {}]
  %s4 = inlined_call_operand.vmem [shape: f32[1,100], index: 4, kind: input, shape index: {}]
  %s5 = inlined_call_operand.vmem [shape: f32[1,100], index: 5, kind: input, shape index: {}]
  %s6 = inlined_call_operand.<no memory space> [shape: f32[1,1], index: 6, kind: input, shape index: {}]
  %s7 = inlined_call_operand.vmem [shape: f32[16,1], index: 7, kind: output, shape index: {}]
  %s8 = sld [smem:[#allocation0]]
  $region38: #{tpu_custom_call.1} parent=0
    _
  %s10 = ssub.s32 1, %s8
  %s11 = scalar_select 0, %s10, %s8
  %v12 = vstv %s6
  %13 = vst [vmem:[#allocation2] sm:$0x1] %v12
  // Predicated region
  $region2: #{tpu_custom_call.1} parent=0 // pred_check
    _
  $region3: #{tpu_custom_call.1} parent=0 // pred_check_branch
    %15 = sbr.rel (0) target = $region5
  $region4: #{tpu_custom_call.1} parent=0 // pred_region
    _
  $region5: #{tpu_custom_call.1} parent=0 // pred_fallthru
    _
  // Predicated region
  $region6: #{tpu_custom_call.1} parent=0 // pred_check
    _
  $region7: #{tpu_custom_call.1} parent=0 // pred_check_branch
    %17 = sbr.rel (0) target = $region9
  $region8: #{tpu_custom_call.1} parent=0 // pred_region
    _
  $region9: #{tpu_custom_call.1} parent=0 // pred_fallthru
    _
  // Predicated region
  $region10: #{tpu_custom_call.1} parent=0 // pred_check
    _
  $region11: #{tpu_custom_call.1} parent=0 // pred_check_branch
    %19 = sbr.rel (0) target = $region13
  $region12: #{tpu_custom_call.1} parent=0 // pred_region
    _
  $region13: #{tpu_custom_call.1} parent=0 // pred_fallthru
    _
  // Predicated region
  $region14: #{tpu_custom_call.1} parent=0 // pred_check
    _
  $region15: #{tpu_custom_call.1} parent=0 // pred_check_branch
    %21 = sbr.rel (0) target = $region17
  $region16: #{tpu_custom_call.1} parent=0 // pred_region
    _
  $region17: #{tpu_custom_call.1} parent=0 // pred_fallthru
    _
  // Predicated region
  $region18: #{tpu_custom_call.1} parent=0 // pred_check
    _
  $region19: #{tpu_custom_call.1} parent=0 // pred_check_branch
    %23 = sbr.rel (0) target = $region21
  $region20: #{tpu_custom_call.1} parent=0 // pred_region
    _
  $region21: #{tpu_custom_call.1} parent=0 // pred_fallthru
    _
  // Predicated region
  $region22: #{tpu_custom_call.1} parent=0 // pred_check
    _
  $region23: #{tpu_custom_call.1} parent=0 // pred_check_branch
    %25 = sbr.rel (0) target = $region25
  $region24: #{tpu_custom_call.1} parent=0 // pred_region
    _
  $region25: #{tpu_custom_call.1} parent=0 // pred_fallthru
    _
  // Predicated region
  $region26: #{tpu_custom_call.1} parent=0 // pred_check
    _
  $region27: #{tpu_custom_call.1} parent=0 // pred_check_branch
    %27 = sbr.rel (0) target = $region29
  $region28: #{tpu_custom_call.1} parent=0 // pred_region
    _
  $region29: #{tpu_custom_call.1} parent=0 // pred_fallthru
    _
  %v29 = vld [vmem:[%s0] sm:$0xf]
  %v30 = vld [vmem:[%s0 + $0x4] sm:$0xf]
  %v31 = vld [vmem:[%s1] sm:$0xf]
  %v32 = vld [vmem:[%s1 + $0x4] sm:$0xf]
  %v33 = vld [vmem:[%s1 + $0x8] sm:$0xf]
  %v34 = vld [vmem:[%s1 + $0xc] sm:$0xf]
  %v35 = vld [vmem:[%s1 + $0x10] sm:$0xf]
  %v36 = vld [vmem:[%s1 + $0x14] sm:$0xf]
  %v37 = vld [vmem:[%s1 + $0x18] sm:$0xf]
  %v38 = vld [vmem:[%s1 + $0x1c] sm:$0xf]
  %v39 = vld [vmem:[%s1 + $0x20] sm:$0xf]
  %v40 = vld [vmem:[%s1 + $0x24] sm:$0xf]
  %v41 = vld [vmem:[%s1 + $0x28] sm:$0xf]
  %v42 = vld [vmem:[%s1 + $0x2c] sm:$0xf]
  %v43 = vld [vmem:[%s1 + $0x30] sm:$0xf]
  %v44 = vld [vmem:[%s1 + $0x34] sm:$0xf]
  %v45 = vld [vmem:[%s1 + $0x38] sm:$0xf]
  %v46 = vld [vmem:[%s1 + $0x3c] sm:$0xf]
  %v47 = vld [vmem:[%s2] sm:$0x1]
  %v49 = vlaneseq
  %v50 = vshrl.u32 %v49, 7
  %v51 = vsub.s32 0, %v50
  %v52 = vrot.slane %v47, %v51
  %v56 = vunpack.c.l.b16 %v29
  %v57 = vunpack.c.l.b16 %v30
  %v58 = vpack.c.b16 %v57, %v56
  %v76 = vunpack.c.l.b16 %v31
  %v77 = vunpack.c.l.b16 %v32
  %v78 = vunpack.c.l.b16 %v33
  %v79 = vunpack.c.l.b16 %v34
  %v80 = vunpack.c.l.b16 %v35
  %v81 = vunpack.c.l.b16 %v36
  %v82 = vunpack.c.l.b16 %v37
  %v83 = vunpack.c.l.b16 %v38
  %v84 = vunpack.c.l.b16 %v39
  %v85 = vunpack.c.l.b16 %v40
  %v86 = vunpack.c.l.b16 %v41
  %v87 = vunpack.c.l.b16 %v42
  %v88 = vunpack.c.l.b16 %v43
  %v89 = vunpack.c.l.b16 %v44
  %v90 = vunpack.c.l.b16 %v45
  %v91 = vunpack.c.l.b16 %v46
  %v92 = vpack.c.b16 %v77, %v76
  %v93 = vpack.c.b16 %v79, %v78
  %v94 = vpack.c.b16 %v81, %v80
  %v95 = vpack.c.b16 %v83, %v82
  %v96 = vpack.c.b16 %v85, %v84
  %v97 = vpack.c.b16 %v87, %v86
  %v98 = vpack.c.b16 %v89, %v88
  %v99 = vpack.c.b16 %v91, %v90
  %108 = vmatprep.subr.bf16.mxu0 0
  %109 = vmatpush1.bf16.msra.mxu0 %v92
  %110 = vmatprep.subr.bf16.mxu0 0
  %111 = vmatpush1.bf16.msra.mxu0 %v93
  %112 = vmatprep.subr.bf16.mxu0 0
  %113 = vmatpush1.bf16.msra.mxu0 %v94
  %114 = vmatprep.subr.bf16.mxu0 0
  %115 = vmatpush1.bf16.msra.mxu0 %v95
  %116 = vmatprep.subr.bf16.mxu0 0
  %117 = vmatpush1.bf16.msra.mxu0 %v96
  %118 = vmatprep.subr.bf16.mxu0 0
  %119 = vmatpush1.bf16.msra.mxu0 %v97
  %120 = vmatprep.subr.bf16.mxu0 0
  %121 = vmatpush1.bf16.msra.mxu0 %v98
  %122 = vmatprep.subr.bf16.mxu0 0
  %123 = vmatpush1.bf16.msra.mxu0 %v99
  %124 = vmatprep.subr.bf16.mxu0 0
  %125 = vmatpush1.bf16.msra.mxu0 0
  %126 = vmatprep.subr.bf16.mxu0 0
  %127 = vmatpush1.bf16.msra.mxu0 0
  %128 = vmatprep.subr.bf16.mxu0 0
  %129 = vmatpush1.bf16.msra.mxu0 0
  %130 = vmatprep.subr.bf16.mxu0 0
  %131 = vmatpush1.bf16.msra.mxu0 0
  %132 = vmatprep.subr.bf16.mxu0 0
  %133 = vmatpush1.bf16.msra.mxu0 0
  %134 = vmatprep.subr.bf16.mxu0 0
  %135 = vmatpush1.bf16.msra.mxu0 0
  %136 = vmatprep.subr.bf16.mxu0 0
  %137 = vmatpush1.bf16.msra.mxu0 0
  %138 = vmatprep.subr.bf16.mxu0 0
  %139 = vmatpush1.bf16.msra.mxu0 0
  %140 = vmatprep.mubr.bf16.mxu0 0
  %141 = vmatmul.mubr.bf16.gmra.mrb[0].mxu0 %v58
  %v142 = vpop.f32.mrb[0].mxu0
  %v143 = vadd.f32 %v52, %v142
  %v144 = vpop.f32.mrb[0].mxu0
  %v145 = vpop.f32.mrb[0].mxu0
  %v146 = vadd.f32 %v52, %v145
  %v147 = vpop.f32.mrb[0].mxu0
  %148 = vdwg.mxu0
  %v149 = vmax.f32 %v143, 0.0
  %v150 = vmax.f32 %v146, 0.0
  %v151 = vpack.c.bf16 %v150, %v149
  %v152 = vld [vmem:[%s3] sm:$0xf]
  %v153 = vld [vmem:[%s3 + $0x4] sm:$0xf]
  %v154 = vld [vmem:[%s3 + $0x8] sm:$0xf]
  %v155 = vld [vmem:[%s3 + $0xc] sm:$0xf]
  %v156 = vld [vmem:[%s3 + $0x10] sm:$0xf]
  %v157 = vld [vmem:[%s3 + $0x14] sm:$0xf]
  %v158 = vld [vmem:[%s3 + $0x18] sm:$0x1]
  %v159 = vld [vmem:[%s4] sm:$0x1]
  %v161 = vlaneseq
  %v162 = vshrl.u32 %v161, 7
  %v163 = vsub.s32 0, %v162
  %v164 = vrot.slane %v159, %v163
  %v173 = vunpack.c.l.b16 %v152
  %v174 = vunpack.c.l.b16 %v153
  %v175 = vunpack.c.l.b16 %v154
  %v176 = vunpack.c.l.b16 %v155
  %v177 = vunpack.c.l.b16 %v156
  %v178 = vunpack.c.l.b16 %v157
  %v179 = vunpack.c.l.b16 %v158
  %v180 = vpack.c.b16 %v174, %v173
  %v181 = vpack.c.b16 %v176, %v175
  %v182 = vpack.c.b16 %v178, %v177
  %v183 = vpack.c.b16 %v179, %v179
  %vm187 = vcmask 408576
  %v189 = vsel %vm187, %v151, 0
  %vm191 = vcmask 1040384
  %v193 = vsel %vm191, %v183, 0
  %195 = vmatprep.subr.bf16.mxu0 0
  %196 = vmatpush1.bf16.msra.mxu0 %v180
  %197 = vmatprep.subr.bf16.mxu0 0
  %198 = vmatpush1.bf16.msra.mxu0 %v181
  %199 = vmatprep.subr.bf16.mxu0 0
  %200 = vmatpush1.bf16.msra.mxu0 %v182
  %201 = vmatprep.subr.bf16.mxu0 0
  %202 = vmatpush1.bf16.msra.mxu0 %v193
  %203 = vmatprep.subr.bf16.mxu0 0
  %204 = vmatpush1.bf16.msra.mxu0 0
  %205 = vmatprep.subr.bf16.mxu0 0
  %206 = vmatpush1.bf16.msra.mxu0 0
  %207 = vmatprep.subr.bf16.mxu0 0
  %208 = vmatpush1.bf16.msra.mxu0 0
  %209 = vmatprep.subr.bf16.mxu0 0
  %210 = vmatpush1.bf16.msra.mxu0 0
  %211 = vmatprep.subr.bf16.mxu0 0
  %212 = vmatpush1.bf16.msra.mxu0 0
  %213 = vmatprep.subr.bf16.mxu0 0
  %214 = vmatpush1.bf16.msra.mxu0 0
  %215 = vmatprep.subr.bf16.mxu0 0
  %216 = vmatpush1.bf16.msra.mxu0 0
  %217 = vmatprep.subr.bf16.mxu0 0
  %218 = vmatpush1.bf16.msra.mxu0 0
  %219 = vmatprep.subr.bf16.mxu0 0
  %220 = vmatpush1.bf16.msra.mxu0 0
  %221 = vmatprep.subr.bf16.mxu0 0
  %222 = vmatpush1.bf16.msra.mxu0 0
  %223 = vmatprep.subr.bf16.mxu0 0
  %224 = vmatpush1.bf16.msra.mxu0 0
  %225 = vmatprep.subr.bf16.mxu0 0
  %226 = vmatpush1.bf16.msra.mxu0 0
  %227 = vmatprep.mubr.bf16.mxu0 0
  %228 = vmatmul.mubr.bf16.gmra.mrb[0].mxu0 %v189
  %v229 = vpop.f32.mrb[0].mxu0
  %v230 = vadd.f32 %v164, %v229
  %v231 = vpop.f32.mrb[0].mxu0
  %v232 = vpop.f32.mrb[0].mxu0
  %v233 = vadd.f32 %v164, %v232
  %v234 = vpop.f32.mrb[0].mxu0
  %235 = vdwg.mxu0
  %v236 = vmax.f32 %v230, 0.0
  %v237 = vmax.f32 %v233, 0.0
  %v238 = vld [vmem:[%s5] sm:$0x1]
  %v240 = vlaneseq
  %v241 = vshrl.u32 %v240, 7
  %v242 = vsub.s32 0, %v241
  %v243 = vrot.slane %v238, %v242
  %v245 = vmul.f32 %v236, %v243
  %v246 = vmul.f32 %v237, %v243
  %vm247 = vcmask 818176
  %v248 = vsel %vm247, %v245, 0.0
  %249 = vadd.xlane.f32.xlu0 %v248
  %v250 = vpop.xlane.xlu0 %249
  %v251 = vsel %vm247, %v246, 0.0
  %252 = vadd.xlane.f32.xlu0 %v251
  %v253 = vpop.xlane.xlu0 %252
  %v254 = vld [vmem:[#allocation2] sm:$0x1]
  %v256 = vlaneseq
  %v257 = vshrl.u32 %v256, 7
  %v258 = vsub.s32 0, %v257
  %v259 = vrot.slane %v254, %v258
  %v261 = vadd.f32 %v250, %v259
  %v262 = vadd.f32 %v253, %v259
  %vm263 = vcmask 7168
  %264 = vst.msk [vmem:[%s7] sm:$0xff] %vm263, %v261
  %265 = vst.msk [vmem:[%s7 + $0x8] sm:$0xff] %vm263, %v262
  // Predicated region
  $region30: #{tpu_custom_call.1} parent=0 // pred_check
    _
  $region31: #{tpu_custom_call.1} parent=0 // pred_check_branch
    %267 = sbr.rel (0) target = $region33
  $region32: #{tpu_custom_call.1} parent=0 // pred_region
    _
  $region33: #{tpu_custom_call.1} parent=0 // pred_fallthru
    _
  // Predicated region
  $region34: #{tpu_custom_call.1} parent=0 // pred_check
    _
  $region35: #{tpu_custom_call.1} parent=0 // pred_check_branch
    %269 = sbr.rel (0) target = $region37
  $region36: #{tpu_custom_call.1} parent=0 // pred_region
    _
  $region37: #{tpu_custom_call.1} parent=0 // pred_fallthru
    _

</llo_original>
